<compile_context>
chip_gen: v6e
topology: v6e:2x2x1
jax: 0.10.0
libtpu: 0.0.40
codegen_flags: <defaults>
</compile_context>

<pallas_src>
import functools

import jax
import jax.numpy as jnp
from jax.experimental import pallas as pl
from jax.experimental.pallas import tpu as pltpu


def _round_up(v, m):
    return (v + m - 1) // m * m


def _cdiv(a, b):
    return -(-a // b)


def _choose_batch_tiling(batch, max_tile=256):
    """Pick (tile_rows, padded_batch).

    Rows are multiples of 16 (bf16 packs 16 rows per sublane tile).  When the
    batch is large enough, use >= 2 grid steps so both of v7x's TensorCores get
    work; size the tile from cdiv(batch, n_tiles) so padding waste is bounded
    by one tile rather than blowing up to a whole 256-row tile.
    """
    if batch < 64:
        tb = _round_up(max(batch, 1), 16)
    else:
        n_tiles = max(2, _cdiv(batch, max_tile))
        tb = _round_up(_cdiv(batch, n_tiles), 16)
    pbatch = _round_up(batch, tb)
    return tb, pbatch


def _mlp_kernel(num_layer, *refs):
    """Fused stack of Linear layers on one batch tile.

    refs = (x_ref, w0_ref, b0_ref, w1_ref, b1_ref, ..., out_ref)
      x_ref : [TB, K0p]   bf16   (batch tile, lane-padded input features)
      wi    : [Kip, Nip]  bf16   (pre-transposed [in, out], zero-padded)
      bi    : [1,  Nip]   f32    (zero-padded)
      out   : [TB, Nlast] f32 (or bf16)
    No nonlinearity between layers (matches the PyTorch Sequential of Linear).
    """
    x_ref = refs[0]
    out_ref = refs[-1]
    param_refs = refs[1:-1]

    h = x_ref[...]                                        # bf16 activations
    for i in range(num_layer):
        w = param_refs[2 * i][...]                        # bf16 [Kp, Np]
        b = param_refs[2 * i + 1][...]                    # f32  [1, Np]
        # MXU matmul with f32 accumulation; bias add in f32 on the VPU.
        acc = jnp.dot(h, w, preferred_element_type=jnp.float32) + b
        if i < num_layer - 1:
            h = acc.astype(jnp.bfloat16)                  # bf16 back into the MXU
        else:
            out_ref[...] = acc.astype(out_ref.dtype)      # lane-dense store


def prepare_ann_params(input_size, weights, biases):
    """One-time parameter prep (do this at load time, NOT per forward call).

    Pre-transposes each PyTorch-layout [out, in] weight to [in, out], zero-pads
    all feature dims to multiples of 128 (lane axis) and casts weights to bf16.
    Biases stay f32 (accumulator dtype).
    """
    dims = [int(input_size)] + [int(w.shape[0]) for w in weights]  # K0, N0..Nlast
    pdims = [_round_up(d, 128) for d in dims]

    packed_w, packed_b = [], []
    for i, (w, b) in enumerate(zip(weights, biases)):
        kin, kout = pdims[i], pdims[i + 1]
        wp = jnp.zeros((kin, kout), jnp.bfloat16)
        wp = wp.at[: w.shape[1], : w.shape[0]].set(w.T.astype(jnp.bfloat16))
        bp = jnp.zeros((1, kout), jnp.float32)
        bp = bp.at[0, : b.shape[0]].set(b.astype(jnp.float32))
        packed_w.append(wp)
        packed_b.append(bp)

    return {"weights": packed_w, "biases": packed_b, "dims": dims, "pdims": pdims}


def ann_forward(x, params, *, out_dtype=jnp.float32, max_batch_tile=256):
    """Run the fused MLP as a single Pallas call.

    x:      [batch, input_size] float32
    params: output of prepare_ann_params()
    Returns [batch, output_size] in out_dtype (default float32).
    """
    packed_w = params["weights"]
    packed_b = params["biases"]
    dims = params["dims"]
    pdims = params["pdims"]
    num_layer = len(packed_w)

    batch, in_size = x.shape
    assert in_size == dims[0], "input feature size mismatch with prepared params"
    out_size = dims[-1]
    out_itemsize = jnp.dtype(out_dtype).itemsize

    tb, pbatch = _choose_batch_tiling(batch, max_batch_tile)

    # Input: zero-pad and cast to bf16 (halves x DMA bytes, feeds MXU natively).
    xp = jnp.zeros((pbatch, pdims[0]), jnp.bfloat16)
    xp = xp.at[:batch, :in_size].set(x.astype(jnp.bfloat16))

    # x / out blocks walk the batch axis; weights & biases are grid-invariant
    # (constant index_map) and single-buffered so they stay resident in VMEM
    # exactly once.
    resident = pl.Buffered(1)
    operands = [xp]
    in_specs = [pl.BlockSpec((tb, pdims[0]), lambda i: (i, 0))]
    for li in range(num_layer):
        kin, kout = pdims[li], pdims[li + 1]
        operands.append(packed_w[li])
        operands.append(packed_b[li])
        in_specs.append(
            pl.BlockSpec((kin, kout), lambda i: (0, 0), pipeline_mode=resident)
        )
        in_specs.append(
            pl.BlockSpec((1, kout), lambda i: (0, 0), pipeline_mode=resident)
        )
    out_spec = pl.BlockSpec((tb, pdims[-1]), lambda i: (i, 0))

    # --- VMEM budget: weights/biases x1 buffer, x/out x2 buffers, activation
    # scratch (f32 acc + bf16 h), plus headroom.  Cap at 64 MiB (v7x per-TC
    # physical VMEM); beyond that a streaming layout is required (see TODO).
    max_np = max(pdims[1:])
    weight_bytes = sum(pdims[i] * pdims[i + 1] for i in range(num_layer)) * 2
    bias_bytes = sum(pdims[1:]) * 4
    needed = (
        weight_bytes
        + bias_bytes
        + 2 * tb * pdims[0] * 2                 # x block, double-buffered bf16
        + 2 * tb * pdims[-1] * out_itemsize     # out block, double-buffered
        + 2 * tb * max_np * (4 + 2)             # live f32 acc + bf16 h per layer
    )
    vmem_limit = min(max(int(needed * 1.25) + (1 << 20), 32 << 20), 64 << 20)

    # Advisory cost hint so XLA can overlap surrounding ops with the kernel.
    flops = 2 * pbatch * sum(pdims[i] * pdims[i + 1] for i in range(num_layer))
    bytes_accessed = (
        xp.size * 2 + weight_bytes + bias_bytes + pbatch * pdims[-1] * out_itemsize
    )
    cost = pl.CostEstimate(
        flops=flops, transcendentals=0, bytes_accessed=bytes_accessed
    )

    kernel = functools.partial(_mlp_kernel, num_layer)

    out_padded = pl.pallas_call(
        kernel,
        out_shape=jax.ShapeDtypeStruct((pbatch, pdims[-1]), out_dtype),
        grid_spec=pltpu.PrefetchScalarGridSpec(
            num_scalar_prefetch=0,
            grid=(pbatch // tb,),
            in_specs=in_specs,
            out_specs=out_spec,
        ),
        compiler_params=pltpu.CompilerParams(
            # Independent batch tiles -> shardable across v7x's two TensorCores.
            dimension_semantics=("parallel",),
            vmem_limit_bytes=vmem_limit,
        ),
        cost_estimate=cost,
    )(*operands)

    return out_padded[:batch, :out_size]


def init_ann_params(key, input_size, hidden_size, num_layer, output_size):
    """Deterministic PyTorch-style init (uniform(-1/sqrt(fan_in), 1/sqrt(fan_in)))."""
    layer_dims = [[hidden_size, hidden_size] for _ in range(num_layer)]
    layer_dims[0][0] = input_size
    layer_dims[-1][1] = output_size

    weights, biases = [], []
    for (fan_in, fan_out) in layer_dims:
        key, kw, kb = jax.random.split(key, 3)
        bound = 1.0 / jnp.sqrt(jnp.float32(fan_in))
        w = jax.random.uniform(kw, (fan_out, fan_in), jnp.float32, -bound, bound)
        b = jax.random.uniform(kb, (fan_out,), jnp.float32, -bound, bound)
        weights.append(w)
        biases.append(b)
    return weights, biases


def ann_reference(x, weights, biases):
    h = x
    for w, b in zip(weights, biases):
        h = h @ w.T + b
    return h


if __name__ == "__main__":
    # Small shapes consistent with ANN(input_size, hidden_size, num_layer, output_size)
    batch = 8
    input_size = 16
    hidden_size = 32
    num_layer = 3
    output_size = 8

    key = jax.random.PRNGKey(0)
    key, kx = jax.random.split(key)
    x = jax.random.normal(kx, (batch, input_size), jnp.float32)

    weights, biases = init_ann_params(
        key, input_size, hidden_size, num_layer, output_size
    )

    # One-time parameter prep (padding / transpose / bf16 cast hoisted out of
    # the per-call path).
    params = prepare_ann_params(input_size, weights, biases)

    out = ann_forward(x, params)
    out = jax.block_until_ready(out)

    ref = ann_reference(x, weights, biases)
    assert out.shape == (batch, output_size)
    # bf16 MXU operands (f32 accumulation) -> looser tolerance than pure f32.
    assert jnp.allclose(out, ref, atol=3e-2, rtol=3e-2), "mismatch vs reference"

    print("KERNEL_OK")
</pallas_src>

<mosaic_0001>
module attributes {stable_mosaic.version = 11 : i64} {
  func.func @_mlp_kernel(%arg0: i32, %arg1: memref<16x128xbf16, #tpu.memory_space<vmem>>, %arg2: memref<128x128xbf16, #tpu.memory_space<vmem>>, %arg3: memref<1x128xf32, #tpu.memory_space<vmem>>, %arg4: memref<128x128xbf16, #tpu.memory_space<vmem>>, %arg5: memref<1x128xf32, #tpu.memory_space<vmem>>, %arg6: memref<128x128xbf16, #tpu.memory_space<vmem>>, %arg7: memref<1x128xf32, #tpu.memory_space<vmem>>, %arg8: memref<16x128xf32, #tpu.memory_space<vmem>>) attributes {dimension_semantics = [#tpu.dimension_semantics<parallel>], iteration_bounds = array<i64: 1>, scalar_prefetch = 0 : i64, scratch_operands = 0 : i64, tpu.core_type = #tpu.core_type<tc>, window_params = [{transform_indices = @transform_0, window_bounds = array<i64: 16, 128>}, {pipeline_mode = #tpu.pipeline_mode<synchronous>, transform_indices = @transform_1, window_bounds = array<i64: 128, 128>}, {pipeline_mode = #tpu.pipeline_mode<synchronous>, transform_indices = @transform_2, window_bounds = array<i64: 1, 128>}, {pipeline_mode = #tpu.pipeline_mode<synchronous>, transform_indices = @transform_3, window_bounds = array<i64: 128, 128>}, {pipeline_mode = #tpu.pipeline_mode<synchronous>, transform_indices = @transform_4, window_bounds = array<i64: 1, 128>}, {pipeline_mode = #tpu.pipeline_mode<synchronous>, transform_indices = @transform_5, window_bounds = array<i64: 128, 128>}, {pipeline_mode = #tpu.pipeline_mode<synchronous>, transform_indices = @transform_6, window_bounds = array<i64: 1, 128>}, {transform_indices = @transform_7, window_bounds = array<i64: 16, 128>}]} {
    %c0 = arith.constant 0 : index
    %c0_0 = arith.constant 0 : index
    %0 = vector.load %arg1[%c0, %c0_0] : memref<16x128xbf16, #tpu.memory_space<vmem>>, vector<16x128xbf16>
    %c0_1 = arith.constant 0 : index
    %c0_2 = arith.constant 0 : index
    %1 = vector.load %arg2[%c0_1, %c0_2] : memref<128x128xbf16, #tpu.memory_space<vmem>>, vector<128x128xbf16>
    %c0_3 = arith.constant 0 : index
    %c0_4 = arith.constant 0 : index
    %2 = vector.load %arg3[%c0_3, %c0_4] : memref<1x128xf32, #tpu.memory_space<vmem>>, vector<1x128xf32>
    %cst = arith.constant dense<0.000000e+00> : vector<16x128xf32>
    %3 = tpu.matmul %0, %1, %cst {dimension_numbers = #tpu.dot_dimension_numbers<[1], [0], [0], [1], [0, 0, 1, 1], [], []>} : vector<16x128xbf16>, vector<128x128xbf16>, vector<16x128xf32> -> vector<16x128xf32>
    %4 = vector.broadcast %2 : vector<1x128xf32> to vector<16x128xf32>
    %5 = arith.addf %3, %4 : vector<16x128xf32>
    %6 = arith.truncf %5 : vector<16x128xf32> to vector<16x128xbf16>
    %c0_5 = arith.constant 0 : index
    %c0_6 = arith.constant 0 : index
    %7 = vector.load %arg4[%c0_5, %c0_6] : memref<128x128xbf16, #tpu.memory_space<vmem>>, vector<128x128xbf16>
    %c0_7 = arith.constant 0 : index
    %c0_8 = arith.constant 0 : index
    %8 = vector.load %arg5[%c0_7, %c0_8] : memref<1x128xf32, #tpu.memory_space<vmem>>, vector<1x128xf32>
    %cst_9 = arith.constant dense<0.000000e+00> : vector<16x128xf32>
    %9 = tpu.matmul %6, %7, %cst_9 {dimension_numbers = #tpu.dot_dimension_numbers<[1], [0], [0], [1], [0, 0, 1, 1], [], []>} : vector<16x128xbf16>, vector<128x128xbf16>, vector<16x128xf32> -> vector<16x128xf32>
    %10 = vector.broadcast %8 : vector<1x128xf32> to vector<16x128xf32>
    %11 = arith.addf %9, %10 : vector<16x128xf32>
    %12 = arith.truncf %11 : vector<16x128xf32> to vector<16x128xbf16>
    %c0_10 = arith.constant 0 : index
    %c0_11 = arith.constant 0 : index
    %13 = vector.load %arg6[%c0_10, %c0_11] : memref<128x128xbf16, #tpu.memory_space<vmem>>, vector<128x128xbf16>
    %c0_12 = arith.constant 0 : index
    %c0_13 = arith.constant 0 : index
    %14 = vector.load %arg7[%c0_12, %c0_13] : memref<1x128xf32, #tpu.memory_space<vmem>>, vector<1x128xf32>
    %cst_14 = arith.constant dense<0.000000e+00> : vector<16x128xf32>
    %15 = tpu.matmul %12, %13, %cst_14 {dimension_numbers = #tpu.dot_dimension_numbers<[1], [0], [0], [1], [0, 0, 1, 1], [], []>} : vector<16x128xbf16>, vector<128x128xbf16>, vector<16x128xf32> -> vector<16x128xf32>
    %16 = vector.broadcast %14 : vector<1x128xf32> to vector<16x128xf32>
    %17 = arith.addf %15, %16 : vector<16x128xf32>
    %c0_15 = arith.constant 0 : index
    %c0_16 = arith.constant 0 : index
    %18 = vector.load %arg8[%c0_15, %c0_16] : memref<16x128xf32, #tpu.memory_space<vmem>>, vector<16x128xf32>
    tpu.vector_store %arg8[%c0_15, %c0_16], %17 {strides = array<i32>} : memref<16x128xf32, #tpu.memory_space<vmem>>, vector<16x128xf32>,
    return
  }
  func.func @transform_0(%arg0: i32) -> (i32, i32) {
    %c0_i32 = arith.constant 0 : i32
    %c0_i32_0 = arith.constant 0 : i32
    return %arg0, %c0_i32 : i32, i32
  }
  func.func @transform_1(%arg0: i32) -> (i32, i32) {
    %c0_i32 = arith.constant 0 : i32
    %c0_i32_0 = arith.constant 0 : i32
    %c0_i32_1 = arith.constant 0 : i32
    return %c0_i32, %c0_i32_0 : i32, i32
  }
  func.func @transform_2(%arg0: i32) -> (i32, i32) {
    %c0_i32 = arith.constant 0 : i32
    %c0_i32_0 = arith.constant 0 : i32
    %c0_i32_1 = arith.constant 0 : i32
    return %c0_i32, %c0_i32_0 : i32, i32
  }
  func.func @transform_3(%arg0: i32) -> (i32, i32) {
    %c0_i32 = arith.constant 0 : i32
    %c0_i32_0 = arith.constant 0 : i32
    %c0_i32_1 = arith.constant 0 : i32
    return %c0_i32, %c0_i32_0 : i32, i32
  }
  func.func @transform_4(%arg0: i32) -> (i32, i32) {
    %c0_i32 = arith.constant 0 : i32
    %c0_i32_0 = arith.constant 0 : i32
    %c0_i32_1 = arith.constant 0 : i32
    return %c0_i32, %c0_i32_0 : i32, i32
  }
  func.func @transform_5(%arg0: i32) -> (i32, i32) {
    %c0_i32 = arith.constant 0 : i32
    %c0_i32_0 = arith.constant 0 : i32
    %c0_i32_1 = arith.constant 0 : i32
    return %c0_i32, %c0_i32_0 : i32, i32
  }
  func.func @transform_6(%arg0: i32) -> (i32, i32) {
    %c0_i32 = arith.constant 0 : i32
    %c0_i32_0 = arith.constant 0 : i32
    %c0_i32_1 = arith.constant 0 : i32
    return %c0_i32, %c0_i32_0 : i32, i32
  }
  func.func @transform_7(%arg0: i32) -> (i32, i32) {
    %c0_i32 = arith.constant 0 : i32
    %c0_i32_0 = arith.constant 0 : i32
    return %arg0, %c0_i32 : i32, i32
  }
}

</mosaic_0001>

<llo_original>
// kernel: tpu_custom_call.1
$region0: #{tpu_custom_call.1}
  #allocation0 [shape = 'u32[]', space=smem, size = 0x4, offset = 0x4, fixed_abs, tag = 'smem constant byte address 0x4 - core index']
  #allocation1 [shape = 'u32[144,128]{1,0:T(1,128)}', space=vmem, size = 0x12000, scoped, tag = 'internal scratch']
  %s0 = inlined_call_operand.hbm [shape: bf16[16,128], index: 0, kind: input, shape index: {}]
  %s1 = inlined_call_operand.hbm [shape: bf16[128,128], index: 1, kind: input, shape index: {}]
  %s2 = inlined_call_operand.vmem [shape: f32[1,128], index: 2, kind: input, shape index: {}]
  %s3 = inlined_call_operand.hbm [shape: bf16[128,128], index: 3, kind: input, shape index: {}]
  %s4 = inlined_call_operand.vmem [shape: f32[1,128], index: 4, kind: input, shape index: {}]
  %s5 = inlined_call_operand.hbm [shape: bf16[128,128], index: 5, kind: input, shape index: {}]
  %s6 = inlined_call_operand.vmem [shape: f32[1,128], index: 6, kind: input, shape index: {}]
  %s7 = inlined_call_operand.hbm [shape: f32[16,128], index: 7, kind: output, shape index: {}]
  %s8 = sld [smem:[#allocation0]]
  $region54: #{tpu_custom_call.1} parent=0
    _
  %s10 = ssub.s32 1, %s8
  %s11 = scalar_select 0, %s10, %s8
  $region1: #{tpu_custom_call.1} parent=0
    #allocation2 [shape = 'u8[4096]{0}', space=vmem, size = 0x1000, scoped, tag = 'input window, operand 0, single buffered']
    #allocation3 [shape = 's32[1]{0}', space=sflag, size = 0x4, scoped, tag = 'scoped memory for tpu_custom_call.1']
    #allocation4 [shape = 's32[1]{0}', space=sflag, size = 0x4, scoped, tag = 'scoped memory for tpu_custom_call.1']
    #allocation5 [shape = 'u8[32768]{0}', space=vmem, size = 0x8000, scoped, tag = 'input window, operand 1, single buffered']
    #allocation6 [shape = 's32[1]{0}', space=sflag, size = 0x4, scoped, tag = 'scoped memory for tpu_custom_call.1']
    #allocation7 [shape = 'u8[32768]{0}', space=vmem, size = 0x8000, scoped, tag = 'input window, operand 3, single buffered']
    #allocation8 [shape = 'u8[32768]{0}', space=vmem, size = 0x8000, scoped, tag = 'input window, operand 5, single buffered']
    #allocation9 [shape = 's32[1]{0}', space=sflag, size = 0x4, scoped, tag = 'scoped memory for tpu_custom_call.1']
    #allocation10 [shape = 'u8[8192]{0}', space=vmem, size = 0x2000, scoped, tag = 'output window, operand 0, single buffered']
    %12 = vsyncpa [#allocation3], 0
    %13 = vsyncpa [#allocation6], 0
    %14 = vsyncpa [#allocation9], 0
    %15 = vsyncpa [#allocation4], 0
    // Predicated region
    $region2: #{tpu_custom_call.1} parent=1 // pred_check
      _
    $region3: #{tpu_custom_call.1} parent=1 // pred_check_branch
      %17 = sbr.rel (0) target = $region5
    $region4: #{tpu_custom_call.1} parent=1 // pred_region
      %s19 = ssub.s32 128, 128
      %20 = vsyncadd [#allocation3], %s19
      %s21 = sshll.u32 [#allocation2], 4
      %s22 = int_to_ptr.vmem [resolvable:$true] %s21
      %27 = dma.hbm_to_vmem [thread:$0]  %s0, 128, %s22, [#allocation3], 64, 64, 4
    $region5: #{tpu_custom_call.1} parent=1 // pred_fallthru
      _
    // Predicated region
    $region6: #{tpu_custom_call.1} parent=1 // pred_check
      _
    $region7: #{tpu_custom_call.1} parent=1 // pred_check_branch
      %29 = sbr.rel (0) target = $region9
    $region8: #{tpu_custom_call.1} parent=1 // pred_region
      %s31 = ssub.s32 1024, 1024
      %32 = vsyncadd [#allocation6], %s31
      %s33 = sshll.u32 [#allocation5], 4
      %s34 = int_to_ptr.vmem [resolvable:$true] %s33
      %39 = dma.hbm_to_vmem [thread:$0]  %s1, 1024, %s34, [#allocation6], 64, 64, 4
    $region9: #{tpu_custom_call.1} parent=1 // pred_fallthru
      _
    // Predicated region
    $region10: #{tpu_custom_call.1} parent=1 // pred_check
      _
    $region11: #{tpu_custom_call.1} parent=1 // pred_check_branch
      %41 = sbr.rel (0) target = $region13
    $region12: #{tpu_custom_call.1} parent=1 // pred_region
      _
    $region13: #{tpu_custom_call.1} parent=1 // pred_fallthru
      _
    // Predicated region
    $region14: #{tpu_custom_call.1} parent=1 // pred_check
      _
    $region15: #{tpu_custom_call.1} parent=1 // pred_check_branch
      %43 = sbr.rel (0) target = $region17
    $region16: #{tpu_custom_call.1} parent=1 // pred_region
      %s45 = ssub.s32 1024, 1024
      %46 = vsyncadd [#allocation6], %s45
      %s47 = sshll.u32 [#allocation7], 4
      %s48 = int_to_ptr.vmem [resolvable:$true] %s47
      %53 = dma.hbm_to_vmem [thread:$0]  %s3, 1024, %s48, [#allocation6], 64, 64, 4
    $region17: #{tpu_custom_call.1} parent=1 // pred_fallthru
      _
    // Predicated region
    $region18: #{tpu_custom_call.1} parent=1 // pred_check
      _
    $region19: #{tpu_custom_call.1} parent=1 // pred_check_branch
      %55 = sbr.rel (0) target = $region21
    $region20: #{tpu_custom_call.1} parent=1 // pred_region
      _
    $region21: #{tpu_custom_call.1} parent=1 // pred_fallthru
      _
    // Predicated region
    $region22: #{tpu_custom_call.1} parent=1 // pred_check
      _
    $region23: #{tpu_custom_call.1} parent=1 // pred_check_branch
      %57 = sbr.rel (0) target = $region25
    $region24: #{tpu_custom_call.1} parent=1 // pred_region
      %s59 = ssub.s32 1024, 1024
      %60 = vsyncadd [#allocation9], %s59
      %s61 = sshll.u32 [#allocation8], 4
      %s62 = int_to_ptr.vmem [resolvable:$true] %s61
      %67 = dma.hbm_to_vmem [thread:$0]  %s5, 1024, %s62, [#allocation9], 64, 64, 4
    $region25: #{tpu_custom_call.1} parent=1 // pred_fallthru
      _
    // Predicated region
    $region26: #{tpu_custom_call.1} parent=1 // pred_check
      _
    $region27: #{tpu_custom_call.1} parent=1 // pred_check_branch
      %69 = sbr.rel (0) target = $region29
    $region28: #{tpu_custom_call.1} parent=1 // pred_region
      _
    $region29: #{tpu_custom_call.1} parent=1 // pred_fallthru
      _
    // Predicated region
    $region30: #{tpu_custom_call.1} parent=1 // pred_check
      _
    $region31: #{tpu_custom_call.1} parent=1 // pred_check_branch
      %71 = sbr.rel (0) target = $region33
    $region32: #{tpu_custom_call.1} parent=1 // pred_region
      %72 = dma.done [#allocation3], 128
    $region33: #{tpu_custom_call.1} parent=1 // pred_fallthru
      _
    // Predicated region
    $region34: #{tpu_custom_call.1} parent=1 // pred_check
      _
    $region35: #{tpu_custom_call.1} parent=1 // pred_check_branch
      %74 = sbr.rel (0) target = $region37
    $region36: #{tpu_custom_call.1} parent=1 // pred_region
      %75 = dma.done [#allocation6], 1024
    $region37: #{tpu_custom_call.1} parent=1 // pred_fallthru
      _
    // Predicated region
    $region38: #{tpu_custom_call.1} parent=1 // pred_check
      _
    $region39: #{tpu_custom_call.1} parent=1 // pred_check_branch
      %77 = sbr.rel (0) target = $region41
    $region40: #{tpu_custom_call.1} parent=1 // pred_region
      %78 = dma.done [#allocation6], 1024
    $region41: #{tpu_custom_call.1} parent=1 // pred_fallthru
      _
    // Predicated region
    $region42: #{tpu_custom_call.1} parent=1 // pred_check
      _
    $region43: #{tpu_custom_call.1} parent=1 // pred_check_branch
      %80 = sbr.rel (0) target = $region45
    $region44: #{tpu_custom_call.1} parent=1 // pred_region
      %81 = dma.done [#allocation9], 1024
    $region45: #{tpu_custom_call.1} parent=1 // pred_fallthru
      _
    %v83 = vld [vmem:[#allocation2] sm:$0xf]
    %v84 = vld [vmem:[#allocation2 + $0x4] sm:$0xf]
    %v85 = vld [vmem:[#allocation5] sm:$0xf]
    %v86 = vld [vmem:[#allocation5 + $0x4] sm:$0xf]
    %v87 = vld [vmem:[#allocation5 + $0x8] sm:$0xf]
    %v88 = vld [vmem:[#allocation5 + $0xc] sm:$0xf]
    %v89 = vld [vmem:[#allocation5 + $0x10] sm:$0xf]
    %v90 = vld [vmem:[#allocation5 + $0x14] sm:$0xf]
    %v91 = vld [vmem:[#allocation5 + $0x18] sm:$0xf]
    %v92 = vld [vmem:[#allocation5 + $0x1c] sm:$0xf]
    %v93 = vld [vmem:[#allocation5 + $0x20] sm:$0xf]
    %v94 = vld [vmem:[#allocation5 + $0x24] sm:$0xf]
    %v95 = vld [vmem:[#allocation5 + $0x28] sm:$0xf]
    %v96 = vld [vmem:[#allocation5 + $0x2c] sm:$0xf]
    %v97 = vld [vmem:[#allocation5 + $0x30] sm:$0xf]
    %v98 = vld [vmem:[#allocation5 + $0x34] sm:$0xf]
    %v99 = vld [vmem:[#allocation5 + $0x38] sm:$0xf]
    %v100 = vld [vmem:[#allocation5 + $0x3c] sm:$0xf]
    %v101 = vld [vmem:[%s2] sm:$0x1]
    %v103 = vlaneseq
    %v104 = vshrl.u32 %v103, 7
    %v105 = vsub.s32 0, %v104
    %v106 = vrot.slane %v101, %v105
    %v110 = vunpack.c.l.b16 %v83
    %v111 = vunpack.c.l.b16 %v84
    %v112 = vpack.c.b16 %v111, %v110
    %v130 = vunpack.c.l.b16 %v85
    %v131 = vunpack.c.l.b16 %v86
    %v132 = vunpack.c.l.b16 %v87
    %v133 = vunpack.c.l.b16 %v88
    %v134 = vunpack.c.l.b16 %v89
    %v135 = vunpack.c.l.b16 %v90
    %v136 = vunpack.c.l.b16 %v91
    %v137 = vunpack.c.l.b16 %v92
    %v138 = vunpack.c.l.b16 %v93
    %v139 = vunpack.c.l.b16 %v94
    %v140 = vunpack.c.l.b16 %v95
    %v141 = vunpack.c.l.b16 %v96
    %v142 = vunpack.c.l.b16 %v97
    %v143 = vunpack.c.l.b16 %v98
    %v144 = vunpack.c.l.b16 %v99
    %v145 = vunpack.c.l.b16 %v100
    %v146 = vpack.c.b16 %v131, %v130
    %v147 = vpack.c.b16 %v133, %v132
    %v148 = vpack.c.b16 %v135, %v134
    %v149 = vpack.c.b16 %v137, %v136
    %v150 = vpack.c.b16 %v139, %v138
    %v151 = vpack.c.b16 %v141, %v140
    %v152 = vpack.c.b16 %v143, %v142
    %v153 = vpack.c.b16 %v145, %v144
    %162 = vmatprep.subr.bf16.mxu0 0
    %163 = vmatpush1.bf16.msra.mxu0 %v153
    %164 = vmatprep.subr.bf16.mxu0 0
    %165 = vmatpush1.bf16.msra.mxu0 %v152
    %166 = vmatprep.subr.bf16.mxu0 0
    %167 = vmatpush1.bf16.msra.mxu0 %v151
    %168 = vmatprep.subr.bf16.mxu0 0
    %169 = vmatpush1.bf16.msra.mxu0 %v150
    %170 = vmatprep.subr.bf16.mxu0 0
    %171 = vmatpush1.bf16.msra.mxu0 %v149
    %172 = vmatprep.subr.bf16.mxu0 0
    %173 = vmatpush1.bf16.msra.mxu0 %v148
    %174 = vmatprep.subr.bf16.mxu0 0
    %175 = vmatpush1.bf16.msra.mxu0 %v147
    %176 = vmatprep.subr.bf16.mxu0 0
    %177 = vmatpush1.bf16.msra.mxu0 %v146
    %178 = vmatprep.subr.bf16.mxu0 0
    %179 = vmatpush2.bf16.msra.mxu0 0
    %180 = vmatprep.subr.bf16.mxu0 0
    %181 = vmatpush2.bf16.msra.mxu0 0
    %182 = vmatprep.subr.bf16.mxu0 0
    %183 = vmatpush2.bf16.msra.mxu0 0
    %184 = vmatprep.subr.bf16.mxu0 0
    %185 = vmatpush2.bf16.msra.mxu0 0
    %186 = vmatprep.subr.bf16.mxu0 0
    %187 = vmatpush2.bf16.msra.mxu0 0
    %188 = vmatprep.subr.bf16.mxu0 0
    %189 = vmatpush2.bf16.msra.mxu0 0
    %190 = vmatprep.subr.bf16.mxu0 0
    %191 = vmatpush2.bf16.msra.mxu0 0
    %192 = vmatprep.subr.bf16.mxu0 0
    %193 = vmatpush2.bf16.msra.mxu0 0
    %194 = vmatprep.mubr.bf16.mxu0 0
    %195 = vmatmul.mubr.bf16.gmra.mxu0 %v112
    %v196 = vpop.f32.mrf.mxu0
    %v197 = vadd.f32 %v106, %v196
    %v198 = vpop.f32.mrf.mxu0
    %v199 = vpop.f32.mrf.mxu0
    %v200 = vadd.f32 %v106, %v199
    %v201 = vpop.f32.mrf.mxu0
    %202 = vdwg.mxu0
    %v203 = vpack.c.bf16 %v200, %v197
    %v204 = vld [vmem:[#allocation7] sm:$0xf]
    %v205 = vld [vmem:[#allocation7 + $0x4] sm:$0xf]
    %v206 = vld [vmem:[#allocation7 + $0x8] sm:$0xf]
    %v207 = vld [vmem:[#allocation7 + $0xc] sm:$0xf]
    %v208 = vld [vmem:[#allocation7 + $0x10] sm:$0xf]
    %v209 = vld [vmem:[#allocation7 + $0x14] sm:$0xf]
    %v210 = vld [vmem:[#allocation7 + $0x18] sm:$0xf]
    %v211 = vld [vmem:[#allocation7 + $0x1c] sm:$0xf]
    %v212 = vld [vmem:[#allocation7 + $0x20] sm:$0xf]
    %v213 = vld [vmem:[#allocation7 + $0x24] sm:$0xf]
    %v214 = vld [vmem:[#allocation7 + $0x28] sm:$0xf]
    %v215 = vld [vmem:[#allocation7 + $0x2c] sm:$0xf]
    %v216 = vld [vmem:[#allocation7 + $0x30] sm:$0xf]
    %v217 = vld [vmem:[#allocation7 + $0x34] sm:$0xf]
    %v218 = vld [vmem:[#allocation7 + $0x38] sm:$0xf]
    %v219 = vld [vmem:[#allocation7 + $0x3c] sm:$0xf]
    %v220 = vld [vmem:[%s4] sm:$0x1]
    %v222 = vlaneseq
    %v223 = vshrl.u32 %v222, 7
    %v224 = vsub.s32 0, %v223
    %v225 = vrot.slane %v220, %v224
    %v243 = vunpack.c.l.b16 %v204
    %v244 = vunpack.c.l.b16 %v205
    %v245 = vunpack.c.l.b16 %v206
    %v246 = vunpack.c.l.b16 %v207
    %v247 = vunpack.c.l.b16 %v208
    %v248 = vunpack.c.l.b16 %v209
    %v249 = vunpack.c.l.b16 %v210
    %v250 = vunpack.c.l.b16 %v211
    %v251 = vunpack.c.l.b16 %v212
    %v252 = vunpack.c.l.b16 %v213
    %v253 = vunpack.c.l.b16 %v214
    %v254 = vunpack.c.l.b16 %v215
    %v255 = vunpack.c.l.b16 %v216
    %v256 = vunpack.c.l.b16 %v217
    %v257 = vunpack.c.l.b16 %v218
    %v258 = vunpack.c.l.b16 %v219
    %v259 = vpack.c.b16 %v244, %v243
    %v260 = vpack.c.b16 %v246, %v245
    %v261 = vpack.c.b16 %v248, %v247
    %v262 = vpack.c.b16 %v250, %v249
    %v263 = vpack.c.b16 %v252, %v251
    %v264 = vpack.c.b16 %v254, %v253
    %v265 = vpack.c.b16 %v256, %v255
    %v266 = vpack.c.b16 %v258, %v257
    %275 = vmatprep.subr.bf16.mxu0 0
    %276 = vmatpush1.bf16.msra.mxu0 %v266
    %277 = vmatprep.subr.bf16.mxu0 0
    %278 = vmatpush1.bf16.msra.mxu0 %v265
    %279 = vmatprep.subr.bf16.mxu0 0
    %280 = vmatpush1.bf16.msra.mxu0 %v264
    %281 = vmatprep.subr.bf16.mxu0 0
    %282 = vmatpush1.bf16.msra.mxu0 %v263
    %283 = vmatprep.subr.bf16.mxu0 0
    %284 = vmatpush1.bf16.msra.mxu0 %v262
    %285 = vmatprep.subr.bf16.mxu0 0
    %286 = vmatpush1.bf16.msra.mxu0 %v261
    %287 = vmatprep.subr.bf16.mxu0 0
    %288 = vmatpush1.bf16.msra.mxu0 %v260
    %289 = vmatprep.subr.bf16.mxu0 0
    %290 = vmatpush1.bf16.msra.mxu0 %v259
    %291 = vmatprep.subr.bf16.mxu0 0
    %292 = vmatpush2.bf16.msra.mxu0 0
    %293 = vmatprep.subr.bf16.mxu0 0
    %294 = vmatpush2.bf16.msra.mxu0 0
    %295 = vmatprep.subr.bf16.mxu0 0
    %296 = vmatpush2.bf16.msra.mxu0 0
    %297 = vmatprep.subr.bf16.mxu0 0
    %298 = vmatpush2.bf16.msra.mxu0 0
    %299 = vmatprep.subr.bf16.mxu0 0
    %300 = vmatpush2.bf16.msra.mxu0 0
    %301 = vmatprep.subr.bf16.mxu0 0
    %302 = vmatpush2.bf16.msra.mxu0 0
    %303 = vmatprep.subr.bf16.mxu0 0
    %304 = vmatpush2.bf16.msra.mxu0 0
    %305 = vmatprep.subr.bf16.mxu0 0
    %306 = vmatpush2.bf16.msra.mxu0 0
    %307 = vmatprep.mubr.bf16.mxu0 0
    %308 = vmatmul.mubr.bf16.gmra.mxu0 %v203
    %v309 = vpop.f32.mrf.mxu0
    %v310 = vadd.f32 %v225, %v309
    %v311 = vpop.f32.mrf.mxu0
    %v312 = vpop.f32.mrf.mxu0
    %v313 = vadd.f32 %v225, %v312
    %v314 = vpop.f32.mrf.mxu0
    %315 = vdwg.mxu0
    %v316 = vpack.c.bf16 %v313, %v310
    %v317 = vld [vmem:[#allocation8] sm:$0xf]
    %v318 = vld [vmem:[#allocation8 + $0x4] sm:$0xf]
    %v319 = vld [vmem:[#allocation8 + $0x8] sm:$0xf]
    %v320 = vld [vmem:[#allocation8 + $0xc] sm:$0xf]
    %v321 = vld [vmem:[#allocation8 + $0x10] sm:$0xf]
    %v322 = vld [vmem:[#allocation8 + $0x14] sm:$0xf]
    %v323 = vld [vmem:[#allocation8 + $0x18] sm:$0xf]
    %v324 = vld [vmem:[#allocation8 + $0x1c] sm:$0xf]
    %v325 = vld [vmem:[#allocation8 + $0x20] sm:$0xf]
    %v326 = vld [vmem:[#allocation8 + $0x24] sm:$0xf]
    %v327 = vld [vmem:[#allocation8 + $0x28] sm:$0xf]
    %v328 = vld [vmem:[#allocation8 + $0x2c] sm:$0xf]
    %v329 = vld [vmem:[#allocation8 + $0x30] sm:$0xf]
    %v330 = vld [vmem:[#allocation8 + $0x34] sm:$0xf]
    %v331 = vld [vmem:[#allocation8 + $0x38] sm:$0xf]
    %v332 = vld [vmem:[#allocation8 + $0x3c] sm:$0xf]
    %v333 = vld [vmem:[%s6] sm:$0x1]
    %v335 = vlaneseq
    %v336 = vshrl.u32 %v335, 7
    %v337 = vsub.s32 0, %v336
    %v338 = vrot.slane %v333, %v337
    %v356 = vunpack.c.l.b16 %v317
    %v357 = vunpack.c.l.b16 %v318
    %v358 = vunpack.c.l.b16 %v319
    %v359 = vunpack.c.l.b16 %v320
    %v360 = vunpack.c.l.b16 %v321
    %v361 = vunpack.c.l.b16 %v322
    %v362 = vunpack.c.l.b16 %v323
    %v363 = vunpack.c.l.b16 %v324
    %v364 = vunpack.c.l.b16 %v325
    %v365 = vunpack.c.l.b16 %v326
    %v366 = vunpack.c.l.b16 %v327
    %v367 = vunpack.c.l.b16 %v328
    %v368 = vunpack.c.l.b16 %v329
    %v369 = vunpack.c.l.b16 %v330
    %v370 = vunpack.c.l.b16 %v331
    %v371 = vunpack.c.l.b16 %v332
    %v372 = vpack.c.b16 %v357, %v356
    %v373 = vpack.c.b16 %v359, %v358
    %v374 = vpack.c.b16 %v361, %v360
    %v375 = vpack.c.b16 %v363, %v362
    %v376 = vpack.c.b16 %v365, %v364
    %v377 = vpack.c.b16 %v367, %v366
    %v378 = vpack.c.b16 %v369, %v368
    %v379 = vpack.c.b16 %v371, %v370
    %388 = vmatprep.subr.bf16.mxu0 0
    %389 = vmatpush1.bf16.msra.mxu0 %v379
    %390 = vmatprep.subr.bf16.mxu0 0
    %391 = vmatpush1.bf16.msra.mxu0 %v378
    %392 = vmatprep.subr.bf16.mxu0 0
    %393 = vmatpush1.bf16.msra.mxu0 %v377
    %394 = vmatprep.subr.bf16.mxu0 0
    %395 = vmatpush1.bf16.msra.mxu0 %v376
    %396 = vmatprep.subr.bf16.mxu0 0
    %397 = vmatpush1.bf16.msra.mxu0 %v375
    %398 = vmatprep.subr.bf16.mxu0 0
    %399 = vmatpush1.bf16.msra.mxu0 %v374
    %400 = vmatprep.subr.bf16.mxu0 0
    %401 = vmatpush1.bf16.msra.mxu0 %v373
    %402 = vmatprep.subr.bf16.mxu0 0
    %403 = vmatpush1.bf16.msra.mxu0 %v372
    %404 = vmatprep.subr.bf16.mxu0 0
    %405 = vmatpush2.bf16.msra.mxu0 0
    %406 = vmatprep.subr.bf16.mxu0 0
    %407 = vmatpush2.bf16.msra.mxu0 0
    %408 = vmatprep.subr.bf16.mxu0 0
    %409 = vmatpush2.bf16.msra.mxu0 0
    %410 = vmatprep.subr.bf16.mxu0 0
    %411 = vmatpush2.bf16.msra.mxu0 0
    %412 = vmatprep.subr.bf16.mxu0 0
    %413 = vmatpush2.bf16.msra.mxu0 0
    %414 = vmatprep.subr.bf16.mxu0 0
    %415 = vmatpush2.bf16.msra.mxu0 0
    %416 = vmatprep.subr.bf16.mxu0 0
    %417 = vmatpush2.bf16.msra.mxu0 0
    %418 = vmatprep.subr.bf16.mxu0 0
    %419 = vmatpush2.bf16.msra.mxu0 0
    %420 = vmatprep.mubr.bf16.mxu0 0
    %421 = vmatmul.mubr.bf16.gmra.mxu0 %v316
    %v422 = vpop.f32.mrf.mxu0
    %v423 = vadd.f32 %v338, %v422
    %v424 = vpop.f32.mrf.mxu0
    %v425 = vpop.f32.mrf.mxu0
    %v426 = vadd.f32 %v338, %v425
    %v427 = vpop.f32.mrf.mxu0
    %428 = vdwg.mxu0
    %429 = vst [vmem:[#allocation10] sm:$0xff] %v423
    %430 = vst [vmem:[#allocation10 + $0x8] sm:$0xff] %v426
    // Predicated region
    $region46: #{tpu_custom_call.1} parent=1 // pred_check
      _
    $region47: #{tpu_custom_call.1} parent=1 // pred_check_branch
      %432 = sbr.rel (0) target = $region49
    $region48: #{tpu_custom_call.1} parent=1 // pred_region
      %s434 = ssub.s32 256, 256
      %435 = vsyncadd [#allocation4], %s434
      %s436 = sshll.u32 [#allocation10], 4
      %s437 = int_to_ptr.vmem [resolvable:$true] %s436
      %442 = dma.vmem_to_hbm [thread:$0]  %s437, 256, %s7, [#allocation4], 128, 128, 8
    $region49: #{tpu_custom_call.1} parent=1 // pred_fallthru
      _
    // Predicated region
    $region50: #{tpu_custom_call.1} parent=1 // pred_check
      _
    $region51: #{tpu_custom_call.1} parent=1 // pred_check_branch
      %444 = sbr.rel (0) target = $region53
    $region52: #{tpu_custom_call.1} parent=1 // pred_region
      %445 = dma.done [#allocation4], 256
    $region53: #{tpu_custom_call.1} parent=1 // pred_fallthru
      _
    %446 = vsyncpa [#allocation3], 1
    %447 = vsyncpa [#allocation6], 1
    %448 = vsyncpa [#allocation9], 1
    %449 = vsyncpa [#allocation4], 1

</llo_original>
